<compile_context>
chip_gen: v7x
topology: tpu7x:2x2x1
jax: 0.10.0
libtpu: 0.0.40
codegen_flags: <defaults>
</compile_context>

<pallas_src>
import functools

import jax
import jax.numpy as jnp
from jax.experimental import pallas as pl
from jax.experimental.pallas import tpu as pltpu

_LANES = 128


def _round_up(x, m):
    return ((x + m - 1) // m) * m


def _mlp_kernel(intent_ref, e_pr_ref, m_ref, w1p_ref, b1_ref, w2_ref, b2_ref,
                o_ref, *, n_slots, vocab, d_pr):
    """One batch tile of the StateEncoder MLP.

    intent_ref : [TB, n_slots]        int32 intent ids
    e_pr_ref   : [TB, d_pr]           f32   price*mask [+extra]
    m_ref      : [n_slots*vocab, Hp]  precomposed embedding @ W1_int (resident)
    w1p_ref    : [d_pr, Hp]           f32   price/extra rows of W1   (resident)
    b1_ref     : [1, Hp]   w2_ref : [Hp, Op]   b2_ref : [1, Op]      (resident)
    o_ref      : [TB, Op]
    """
    tb = intent_ref.shape[0]
    k = n_slots * vocab

    # Fused embedding lookup: one-hot(ids) @ (embedding @ W1_int) -> a single
    # K = n_slots*vocab MXU matmul; no [TB, emb*L] activation ever hits HBM.
    ids = intent_ref[...]                                     # [TB, n_slots]
    col = jax.lax.broadcasted_iota(jnp.int32, (tb, k), 1)
    onehot = jnp.zeros((tb, k), jnp.float32)
    for l in range(n_slots):                                  # static unroll (tiny)
        onehot += (col == (ids[:, l:l + 1] + l * vocab)).astype(jnp.float32)
    h = jnp.dot(onehot.astype(m_ref.dtype), m_ref[...],
                preferred_element_type=jnp.float32)
    h += b1_ref[...]

    # Price/extra contribution: depth-d_pr contraction done as VPU broadcast-FMA
    # (an MXU matmul with K=2 wastes a full push/pop per grid step).
    for j in range(d_pr):                                     # static unroll (tiny)
        h += e_pr_ref[:, j:j + 1] * w1p_ref[j:j + 1, :]

    h = jnp.maximum(h, 0.0)                                   # ReLU (f32, VPU)
    o = jnp.dot(h.astype(w2_ref.dtype), w2_ref[...],
                preferred_element_type=jnp.float32) + b2_ref[...]
    o_ref[...] = o.astype(o_ref.dtype)


def state_encoder_forward(params, e_intent, e_price, e_pmask, e_extra=None, *,
                          state_length=2, fix_emb=False, use_bf16=True,
                          out_dtype=jnp.float32, max_batch_tile=2048):
    """Equivalent of StateEncoder.forward (num_layer=1)."""
    emb = params["embedding"]                  # [vocab, emb_dim]
    vocab, emb_dim = emb.shape
    w1, b1 = params["w1"], params["b1"]        # [in_dim, hidden], [1, hidden]
    w2, b2 = params["w2"], params["b2"]        # [hidden, out],    [1, out]
    d_int = emb_dim * state_length
    hidden = w1.shape[1]
    out_size = w2.shape[1]

    # --- tiny weight-side prep (do once at load time in production) ---------
    if fix_emb:
        emb = jax.lax.stop_gradient(emb)
    # Precompose per-slot tables  M_l = embedding @ W1[l*emb:(l+1)*emb].
    m_tbl = jnp.concatenate(
        [emb @ w1[l * emb_dim:(l + 1) * emb_dim] for l in range(state_length)],
        axis=0)                                # [L*vocab, hidden]
    w1_pr = w1[d_int:]                         # [L+extra, hidden]

    # Zero-pad hidden dim to 128 lanes so intermediates stay lane-dense.
    h_pad = -hidden % _LANES
    if h_pad:
        m_tbl = jnp.pad(m_tbl, ((0, 0), (0, h_pad)))
        w1_pr = jnp.pad(w1_pr, ((0, 0), (0, h_pad)))
        b1 = jnp.pad(b1, ((0, 0), (0, h_pad)))
        w2 = jnp.pad(w2, ((0, h_pad), (0, 0)))
    Hp = hidden + h_pad
    Op = out_size                              # unpadded output: fewer HBM bytes, no post-slice copy

    mxu_dtype = jnp.bfloat16 if use_bf16 else jnp.float32
    m_tbl = m_tbl.astype(mxu_dtype)
    w2 = w2.astype(mxu_dtype)
    w1_pr = w1_pr.astype(jnp.float32)          # VPU path stays f32
    b1 = b1.astype(jnp.float32)
    b2 = b2.astype(jnp.float32)

    # --- streamed activations ------------------------------------------------
    ids = e_intent.reshape(-1, state_length).astype(jnp.int32)
    e_pr = (e_price * e_pmask).reshape(-1, state_length).astype(jnp.float32)
    if e_extra is not None:
        e_pr = jnp.concatenate([e_pr, e_extra.astype(jnp.float32)], axis=1)
    d_pr = e_pr.shape[1]
    B = ids.shape[0]

    # --- batch tiling ---------------------------------------------------------
    align = 16 if (use_bf16 or jnp.dtype(out_dtype) == jnp.bfloat16) else 8
    TB = min(_round_up(max_batch_tile, align), _round_up(B, align))
    # Keep >=2 grid steps when possible so both v7x TensorCores get work.
    if _round_up(B, TB) == TB and TB >= 2 * align:
        TB = _round_up((TB + 1) // 2, align)
    Bp = _round_up(B, TB)
    if Bp != B:
        ids = jnp.pad(ids, ((0, Bp - B), (0, 0)))
        e_pr = jnp.pad(e_pr, ((0, Bp - B), (0, 0)))

    grid = (Bp // TB,)

    # Scoped-VMEM budget: double-buffered streamed tiles + resident weights +
    # f32 temporaries, with headroom (explicit because v5e defaults to 16 MiB).
    out_isz = jnp.dtype(out_dtype).itemsize
    w_isz = jnp.dtype(mxu_dtype).itemsize
    est = (2 * TB * (state_length * 4 + d_pr * 4 + Op * out_isz)
           + 2 * (m_tbl.size * w_isz + w2.size * w_isz
                  + (w1_pr.size + b1.size + b2.size) * 4)
           + 2 * TB * (Hp + state_length * vocab) * 4)
    vmem_limit = int(min(64 << 20, max(32 << 20, 2 * est)))

    kernel = functools.partial(_mlp_kernel, n_slots=state_length, vocab=vocab,
                               d_pr=d_pr)
    out = pl.pallas_call(
        kernel,
        out_shape=jax.ShapeDtypeStruct((Bp, Op), out_dtype),
        grid_spec=pltpu.PrefetchScalarGridSpec(
            num_scalar_prefetch=0,
            grid=grid,
            in_specs=[
                pl.BlockSpec((TB, state_length), lambda i: (i, 0)),          # intent ids
                pl.BlockSpec((TB, d_pr), lambda i: (i, 0)),                  # price*mask[+extra]
                pl.BlockSpec((state_length * vocab, Hp), lambda i: (0, 0)),  # M table (resident)
                pl.BlockSpec((d_pr, Hp), lambda i: (0, 0)),                  # W1 price rows
                pl.BlockSpec((1, Hp), lambda i: (0, 0)),                     # b1
                pl.BlockSpec((Hp, Op), lambda i: (0, 0)),                    # W2
                pl.BlockSpec((1, Op), lambda i: (0, 0)),                     # b2
            ],
            out_specs=pl.BlockSpec((TB, Op), lambda i: (i, 0)),
        ),
        compiler_params=pltpu.CompilerParams(
            dimension_semantics=("parallel",),    # shard batch tiles on v7x's 2 TCs
            vmem_limit_bytes=vmem_limit),
    )(ids, e_pr, m_tbl, w1_pr, b1, w2, b2)

    return out[:B] if Bp != B else out


if __name__ == "__main__":
    key = jax.random.PRNGKey(0)

    # Shapes implied by the module defaults.
    vocab, emb_dim = 16, 32
    state_length = 2
    hidden, out_size = 64, 64
    batch = 2
    in_dim = emb_dim * state_length + state_length  # = 66

    ks = jax.random.split(key, 8)
    params = {
        "embedding": jax.random.normal(ks[0], (vocab, emb_dim), jnp.float32) * 0.1,
        "w1": jax.random.normal(ks[1], (in_dim, hidden), jnp.float32) / jnp.sqrt(in_dim),
        "b1": jax.random.normal(ks[2], (1, hidden), jnp.float32) * 0.01,
        "w2": jax.random.normal(ks[3], (hidden, out_size), jnp.float32) / jnp.sqrt(hidden),
        "b2": jax.random.normal(ks[4], (1, out_size), jnp.float32) * 0.01,
    }

    e_intent = jax.random.randint(ks[5], (batch, state_length), 0, vocab)
    e_price = jax.random.normal(ks[6], (batch, state_length), jnp.float32)
    e_pmask = (jax.random.uniform(ks[7], (batch, state_length)) > 0.3).astype(jnp.float32)

    # Plain-JAX reference of the same forward pass (semantic check).
    x_int = jnp.take(params["embedding"], e_intent.reshape(-1), axis=0).reshape(batch, -1)
    x_pr = (e_price * e_pmask).reshape(batch, -1)
    x = jnp.concatenate([x_int, x_pr], axis=1)
    ref = jnp.maximum(x @ params["w1"] + params["b1"], 0.0) @ params["w2"] + params["b2"]

    # f32 MXU path: tight tolerance.
    fwd_f32 = jax.jit(functools.partial(state_encoder_forward,
                                        state_length=state_length, use_bf16=False))
    out_f32 = jax.block_until_ready(fwd_f32(params, e_intent, e_price, e_pmask, None))
    assert out_f32.shape == (batch, out_size)
    assert jnp.allclose(out_f32, ref, atol=1e-4, rtol=1e-4), "f32 path mismatch vs reference"

    # Default bf16 MXU fast path: validated with a looser tolerance.
    fwd_bf16 = jax.jit(functools.partial(state_encoder_forward,
                                         state_length=state_length, use_bf16=True))
    out_bf16 = jax.block_until_ready(fwd_bf16(params, e_intent, e_price, e_pmask, None))
    assert out_bf16.shape == (batch, out_size)
    assert jnp.allclose(out_bf16, ref, atol=3e-2, rtol=3e-2), "bf16 path mismatch vs reference"

    print("KERNEL_OK")
</pallas_src>

<mosaic_0001>
module attributes {stable_mosaic.version = 11 : i64} {
  func.func @_mlp_kernel(%arg0: i32, %arg1: memref<8x2xi32, #tpu.memory_space<vmem>>, %arg2: memref<8x2xf32, #tpu.memory_space<vmem>>, %arg3: memref<32x128xf32, #tpu.memory_space<vmem>>, %arg4: memref<2x128xf32, #tpu.memory_space<vmem>>, %arg5: memref<1x128xf32, #tpu.memory_space<vmem>>, %arg6: memref<128x64xf32, #tpu.memory_space<vmem>>, %arg7: memref<1x64xf32, #tpu.memory_space<vmem>>, %arg8: memref<8x64xf32, #tpu.memory_space<vmem>>) attributes {dimension_semantics = [#tpu.dimension_semantics<parallel>], iteration_bounds = array<i64: 1>, scalar_prefetch = 0 : i64, scratch_operands = 0 : i64, tpu.core_type = #tpu.core_type<tc>, window_params = [{transform_indices = @transform_0, window_bounds = array<i64: 8, 2>}, {transform_indices = @transform_1, window_bounds = array<i64: 8, 2>}, {pipeline_mode = #tpu.pipeline_mode<synchronous>, transform_indices = @transform_2, window_bounds = array<i64: 32, 128>}, {pipeline_mode = #tpu.pipeline_mode<synchronous>, transform_indices = @transform_3, window_bounds = array<i64: 2, 128>}, {pipeline_mode = #tpu.pipeline_mode<synchronous>, transform_indices = @transform_4, window_bounds = array<i64: 1, 128>}, {pipeline_mode = #tpu.pipeline_mode<synchronous>, transform_indices = @transform_5, window_bounds = array<i64: 128, 64>}, {pipeline_mode = #tpu.pipeline_mode<synchronous>, transform_indices = @transform_6, window_bounds = array<i64: 1, 64>}, {transform_indices = @transform_7, window_bounds = array<i64: 8, 64>}]} {
    %c0 = arith.constant 0 : index
    %c0_0 = arith.constant 0 : index
    %0 = vector.load %arg1[%c0, %c0_0] : memref<8x2xi32, #tpu.memory_space<vmem>>, vector<8x2xi32>
    %1 = tpu.iota {dimensions = array<i32: 1>} : vector<8x32xi32>
    %cst = arith.constant 0.000000e+00 : f32
    %2 = vector.broadcast %cst : f32 to vector<8x32xf32>
    %3 = vector.extract_strided_slice %0 {offsets = [0, 0], sizes = [8, 1], strides = [1, 1]} : vector<8x2xi32> to vector<8x1xi32>
    %c0_i32 = arith.constant 0 : i32
    %4 = vector.broadcast %c0_i32 : i32 to vector<8x1xi32>
    %5 = arith.addi %3, %4 : vector<8x1xi32>
    %6 = vector.broadcast %5 : vector<8x1xi32> to vector<8x32xi32>
    %7 = arith.cmpi eq, %1, %6 : vector<8x32xi32>
    %8 = arith.extui %7 : vector<8x32xi1> to vector<8x32xi32>
    %9 = arith.sitofp %8 : vector<8x32xi32> to vector<8x32xf32>
    %10 = arith.addf %2, %9 : vector<8x32xf32>
    %11 = vector.extract_strided_slice %0 {offsets = [0, 1], sizes = [8, 1], strides = [1, 1]} : vector<8x2xi32> to vector<8x1xi32>
    %c16_i32 = arith.constant 16 : i32
    %12 = vector.broadcast %c16_i32 : i32 to vector<8x1xi32>
    %13 = arith.addi %11, %12 : vector<8x1xi32>
    %14 = vector.broadcast %13 : vector<8x1xi32> to vector<8x32xi32>
    %15 = arith.cmpi eq, %1, %14 : vector<8x32xi32>
    %16 = arith.extui %15 : vector<8x32xi1> to vector<8x32xi32>
    %17 = arith.sitofp %16 : vector<8x32xi32> to vector<8x32xf32>
    %18 = arith.addf %10, %17 : vector<8x32xf32>
    %c0_1 = arith.constant 0 : index
    %c0_2 = arith.constant 0 : index
    %19 = vector.load %arg3[%c0_1, %c0_2] : memref<32x128xf32, #tpu.memory_space<vmem>>, vector<32x128xf32>
    %cst_3 = arith.constant dense<0.000000e+00> : vector<8x128xf32>
    %20 = tpu.matmul %18, %19, %cst_3 {dimension_numbers = #tpu.dot_dimension_numbers<[1], [0], [0], [1], [0, 0, 1, 1], [], []>} : vector<8x32xf32>, vector<32x128xf32>, vector<8x128xf32> -> vector<8x128xf32>
    %c0_4 = arith.constant 0 : index
    %c0_5 = arith.constant 0 : index
    %21 = vector.load %arg5[%c0_4, %c0_5] : memref<1x128xf32, #tpu.memory_space<vmem>>, vector<1x128xf32>
    %22 = vector.broadcast %21 : vector<1x128xf32> to vector<8x128xf32>
    %23 = arith.addf %20, %22 : vector<8x128xf32>
    %c0_6 = arith.constant 0 : index
    %c0_7 = arith.constant 0 : index
    %24 = vector.load %arg2[%c0_6, %c0_7] : memref<8x2xf32, #tpu.memory_space<vmem>>, vector<8x1xf32>
    %c0_8 = arith.constant 0 : index
    %c0_9 = arith.constant 0 : index
    %25 = vector.load %arg4[%c0_8, %c0_9] : memref<2x128xf32, #tpu.memory_space<vmem>>, vector<1x128xf32>
    %26 = vector.broadcast %24 : vector<8x1xf32> to vector<8x128xf32>
    %27 = vector.broadcast %25 : vector<1x128xf32> to vector<8x128xf32>
    %28 = arith.mulf %26, %27 : vector<8x128xf32>
    %29 = arith.addf %23, %28 : vector<8x128xf32>
    %c0_10 = arith.constant 0 : index
    %c1 = arith.constant 1 : index
    %30 = vector.load %arg2[%c0_10, %c1] : memref<8x2xf32, #tpu.memory_space<vmem>>, vector<8x1xf32>
    %c1_11 = arith.constant 1 : index
    %c0_12 = arith.constant 0 : index
    %31 = vector.load %arg4[%c1_11, %c0_12] : memref<2x128xf32, #tpu.memory_space<vmem>>, vector<1x128xf32>
    %32 = vector.broadcast %30 : vector<8x1xf32> to vector<8x128xf32>
    %33 = vector.broadcast %31 : vector<1x128xf32> to vector<8x128xf32>
    %34 = arith.mulf %32, %33 : vector<8x128xf32>
    %35 = arith.addf %29, %34 : vector<8x128xf32>
    %cst_13 = arith.constant 0.000000e+00 : f32
    %36 = vector.broadcast %cst_13 : f32 to vector<8x128xf32>
    %37 = arith.maximumf %35, %36 : vector<8x128xf32>
    %c0_14 = arith.constant 0 : index
    %c0_15 = arith.constant 0 : index
    %38 = vector.load %arg6[%c0_14, %c0_15] : memref<128x64xf32, #tpu.memory_space<vmem>>, vector<128x64xf32>
    %cst_16 = arith.constant dense<0.000000e+00> : vector<8x64xf32>
    %39 = tpu.matmul %37, %38, %cst_16 {dimension_numbers = #tpu.dot_dimension_numbers<[1], [0], [0], [1], [0, 0, 1, 1], [], []>} : vector<8x128xf32>, vector<128x64xf32>, vector<8x64xf32> -> vector<8x64xf32>
    %c0_17 = arith.constant 0 : index
    %c0_18 = arith.constant 0 : index
    %40 = vector.load %arg7[%c0_17, %c0_18] : memref<1x64xf32, #tpu.memory_space<vmem>>, vector<1x64xf32>
    %41 = vector.broadcast %40 : vector<1x64xf32> to vector<8x64xf32>
    %42 = arith.addf %39, %41 : vector<8x64xf32>
    %c0_19 = arith.constant 0 : index
    %c0_20 = arith.constant 0 : index
    %43 = vector.load %arg8[%c0_19, %c0_20] : memref<8x64xf32, #tpu.memory_space<vmem>>, vector<8x64xf32>
    tpu.vector_store %arg8[%c0_19, %c0_20], %42 {strides = array<i32>} : memref<8x64xf32, #tpu.memory_space<vmem>>, vector<8x64xf32>,
    return
  }
  func.func @transform_0(%arg0: i32) -> (i32, i32) {
    %c0_i32 = arith.constant 0 : i32
    %c0_i32_0 = arith.constant 0 : i32
    return %arg0, %c0_i32 : i32, i32
  }
  func.func @transform_1(%arg0: i32) -> (i32, i32) {
    %c0_i32 = arith.constant 0 : i32
    %c0_i32_0 = arith.constant 0 : i32
    return %arg0, %c0_i32 : i32, i32
  }
  func.func @transform_2(%arg0: i32) -> (i32, i32) {
    %c0_i32 = arith.constant 0 : i32
    %c0_i32_0 = arith.constant 0 : i32
    %c0_i32_1 = arith.constant 0 : i32
    return %c0_i32, %c0_i32_0 : i32, i32
  }
  func.func @transform_3(%arg0: i32) -> (i32, i32) {
    %c0_i32 = arith.constant 0 : i32
    %c0_i32_0 = arith.constant 0 : i32
    %c0_i32_1 = arith.constant 0 : i32
    return %c0_i32, %c0_i32_0 : i32, i32
  }
  func.func @transform_4(%arg0: i32) -> (i32, i32) {
    %c0_i32 = arith.constant 0 : i32
    %c0_i32_0 = arith.constant 0 : i32
    %c0_i32_1 = arith.constant 0 : i32
    return %c0_i32, %c0_i32_0 : i32, i32
  }
  func.func @transform_5(%arg0: i32) -> (i32, i32) {
    %c0_i32 = arith.constant 0 : i32
    %c0_i32_0 = arith.constant 0 : i32
    %c0_i32_1 = arith.constant 0 : i32
    return %c0_i32, %c0_i32_0 : i32, i32
  }
  func.func @transform_6(%arg0: i32) -> (i32, i32) {
    %c0_i32 = arith.constant 0 : i32
    %c0_i32_0 = arith.constant 0 : i32
    %c0_i32_1 = arith.constant 0 : i32
    return %c0_i32, %c0_i32_0 : i32, i32
  }
  func.func @transform_7(%arg0: i32) -> (i32, i32) {
    %c0_i32 = arith.constant 0 : i32
    %c0_i32_0 = arith.constant 0 : i32
    return %arg0, %c0_i32 : i32, i32
  }
}

</mosaic_0001>

<llo_original>
// kernel: mul.1
$region0: #{mul.1}
  #allocation0 [shape = 's32[1]{0}', space=sflag, size = 0x4, scoped, tag = 'scoped memory for mul.1']
  %s0 = inlined_call_operand.vmem [shape: f32[2,2], index: 0, kind: input, shape index: {}]
  %s1 = inlined_call_operand.vmem [shape: f32[2,2], index: 1, kind: input, shape index: {}]
  %s2 = inlined_call_operand.vmem [shape: f32[2,2], index: 2, kind: output, shape index: {}]
  %v3 = vld [vmem:[%s0] sm:$0x3]
  %v4 = vld [vmem:[%s1] sm:$0x3]
  %5 = xla_tuple %v3, %v4
  %6 = xla_tuple %5
  %v7 = vmul.f32 %v3, %v4
  %8 = xla_tuple %v7
  %9 = vst [vmem:[%s2] sm:$0x3] %v7

// kernel: state_encoder_forward.1
$region0: #{state_encoder_forward.1}
  #allocation0 [shape = 'u32[]', space=smem, size = 0x4, offset = 0x4, fixed_abs, tag = 'smem constant byte address 0x4 - core index']
  #allocation1 [shape = 'u32[144,128]{1,0:T(1,128)}', space=vmem, size = 0x12000, scoped, tag = 'internal scratch']
  %s0 = inlined_call_operand.vmem [shape: s32[8,2], index: 0, kind: input, shape index: {}]
  %s1 = inlined_call_operand.vmem [shape: f32[8,2], index: 1, kind: input, shape index: {}]
  %s2 = inlined_call_operand.vmem [shape: f32[32,128], index: 2, kind: input, shape index: {}]
  %s3 = inlined_call_operand.vmem [shape: f32[2,128], index: 3, kind: input, shape index: {}]
  %s4 = inlined_call_operand.vmem [shape: f32[1,128], index: 4, kind: input, shape index: {}]
  %s5 = inlined_call_operand.vmem [shape: f32[128,64], index: 5, kind: input, shape index: {}]
  %s6 = inlined_call_operand.vmem [shape: f32[1,64], index: 6, kind: input, shape index: {}]
  %s7 = inlined_call_operand.vmem [shape: f32[8,64], index: 7, kind: output, shape index: {}]
  %s8 = sld [smem:[#allocation0]]
  $region38: #{state_encoder_forward.1} parent=0
    _
  %s10 = ssub.s32 1, %s8
  %s11 = scalar_select 0, %s10, %s8
  // Predicated region
  $region2: #{state_encoder_forward.1} parent=0 // pred_check
    _
  $region3: #{state_encoder_forward.1} parent=0 // pred_check_branch
    %13 = sbr.rel (0) target = $region5
  $region4: #{state_encoder_forward.1} parent=0 // pred_region
    _
  $region5: #{state_encoder_forward.1} parent=0 // pred_fallthru
    _
  // Predicated region
  $region6: #{state_encoder_forward.1} parent=0 // pred_check
    _
  $region7: #{state_encoder_forward.1} parent=0 // pred_check_branch
    %15 = sbr.rel (0) target = $region9
  $region8: #{state_encoder_forward.1} parent=0 // pred_region
    _
  $region9: #{state_encoder_forward.1} parent=0 // pred_fallthru
    _
  // Predicated region
  $region10: #{state_encoder_forward.1} parent=0 // pred_check
    _
  $region11: #{state_encoder_forward.1} parent=0 // pred_check_branch
    %17 = sbr.rel (0) target = $region13
  $region12: #{state_encoder_forward.1} parent=0 // pred_region
    _
  $region13: #{state_encoder_forward.1} parent=0 // pred_fallthru
    _
  // Predicated region
  $region14: #{state_encoder_forward.1} parent=0 // pred_check
    _
  $region15: #{state_encoder_forward.1} parent=0 // pred_check_branch
    %19 = sbr.rel (0) target = $region17
  $region16: #{state_encoder_forward.1} parent=0 // pred_region
    _
  $region17: #{state_encoder_forward.1} parent=0 // pred_fallthru
    _
  // Predicated region
  $region18: #{state_encoder_forward.1} parent=0 // pred_check
    _
  $region19: #{state_encoder_forward.1} parent=0 // pred_check_branch
    %21 = sbr.rel (0) target = $region21
  $region20: #{state_encoder_forward.1} parent=0 // pred_region
    _
  $region21: #{state_encoder_forward.1} parent=0 // pred_fallthru
    _
  // Predicated region
  $region22: #{state_encoder_forward.1} parent=0 // pred_check
    _
  $region23: #{state_encoder_forward.1} parent=0 // pred_check_branch
    %23 = sbr.rel (0) target = $region25
  $region24: #{state_encoder_forward.1} parent=0 // pred_region
    _
  $region25: #{state_encoder_forward.1} parent=0 // pred_fallthru
    _
  // Predicated region
  $region26: #{state_encoder_forward.1} parent=0 // pred_check
    _
  $region27: #{state_encoder_forward.1} parent=0 // pred_check_branch
    %25 = sbr.rel (0) target = $region29
  $region28: #{state_encoder_forward.1} parent=0 // pred_region
    _
  $region29: #{state_encoder_forward.1} parent=0 // pred_fallthru
    _
  %v26 = vld [vmem:[%s0] sm:$0xff]
  %v27 = vlaneseq
  %v28 = vand.u32 %v27, 127
  %29 = vset.pattern.permute.xlu0 0
  %30 = vperm.xlu0 %29, %v26
  %v31 = vpop.permute.xlu0 %30
  %vm32 = vcmp.eq.s32.totalorder %v28, %v31
  %v33 = vsel %vm32, 1, 0
  %v34 = vcvt.s32.f32 %v33
  %v35 = vadd.f32 %v34, 0.0
  %v36 = vadd.s32 %v26, 16
  %37 = vset.pattern.permute.xlu0 1
  %38 = vperm.xlu0 %37, %v36
  %v39 = vpop.permute.xlu0 %38
  %vm40 = vcmp.eq.s32.totalorder %v28, %v39
  %v41 = vsel %vm40, 1, 0
  %v42 = vcvt.s32.f32 %v41
  %v43 = vadd.f32 %v35, %v42
  %v44 = vld [vmem:[%s2] sm:$0xff]
  %v45 = vld [vmem:[%s2 + $0x8] sm:$0xff]
  %v46 = vld [vmem:[%s2 + $0x10] sm:$0xff]
  %v47 = vld [vmem:[%s2 + $0x18] sm:$0xff]
  %v48 = vld [vmem:[%s4] sm:$0x1]
  %v50 = vlaneseq
  %v51 = vshrl.u32 %v50, 7
  %v52 = vsub.s32 0, %v51
  %v53 = vrot.slane %v48, %v52
  %vm55 = vcmask 261120
  %v57 = vsel %vm55, %v43, 0
  %59 = vmatprep.subr.mxu0 0.0
  %60 = vmatpush1.msra.mxu0 %v44
  %61 = vmatprep.subr.mxu0 0.0
  %62 = vmatpush1.msra.mxu0 %v45
  %63 = vmatprep.subr.mxu0 0.0
  %64 = vmatpush1.msra.mxu0 %v46
  %65 = vmatprep.subr.mxu0 0.0
  %66 = vmatpush1.msra.mxu0 %v47
  %67 = vmatprep.subr.mxu0 0.0
  %68 = vmatpush1.msra.mxu0 0.0
  %69 = vmatprep.subr.mxu0 0.0
  %70 = vmatpush1.msra.mxu0 0.0
  %71 = vmatprep.subr.mxu0 0.0
  %72 = vmatpush1.msra.mxu0 0.0
  %73 = vmatprep.subr.mxu0 0.0
  %74 = vmatpush1.msra.mxu0 0.0
  %75 = vmatprep.subr.mxu0 0.0
  %76 = vmatpush1.msra.mxu0 0.0
  %77 = vmatprep.subr.mxu0 0.0
  %78 = vmatpush1.msra.mxu0 0.0
  %79 = vmatprep.subr.mxu0 0.0
  %80 = vmatpush1.msra.mxu0 0.0
  %81 = vmatprep.subr.mxu0 0.0
  %82 = vmatpush1.msra.mxu0 0.0
  %83 = vmatprep.subr.mxu0 0.0
  %84 = vmatpush1.msra.mxu0 0.0
  %85 = vmatprep.subr.mxu0 0.0
  %86 = vmatpush1.msra.mxu0 0.0
  %87 = vmatprep.subr.mxu0 0.0
  %88 = vmatpush1.msra.mxu0 0.0
  %89 = vmatprep.subr.mxu0 0.0
  %90 = vmatpush1.msra.mxu0 0.0
  %91 = vmatprep.subr.mxu0 0.0
  %92 = vmatpush1.msra.mxu0 0.0
  %93 = vmatprep.subr.mxu0 0.0
  %94 = vmatpush1.msra.mxu0 0.0
  %95 = vmatprep.subr.mxu0 0.0
  %96 = vmatpush1.msra.mxu0 0.0
  %97 = vmatprep.subr.mxu0 0.0
  %98 = vmatpush1.msra.mxu0 0.0
  %99 = vmatprep.subr.mxu0 0.0
  %100 = vmatpush1.msra.mxu0 0.0
  %101 = vmatprep.subr.mxu0 0.0
  %102 = vmatpush1.msra.mxu0 0.0
  %103 = vmatprep.subr.mxu0 0.0
  %104 = vmatpush1.msra.mxu0 0.0
  %105 = vmatprep.subr.mxu0 0.0
  %106 = vmatpush1.msra.mxu0 0.0
  %107 = vmatprep.subr.mxu0 0.0
  %108 = vmatpush1.msra.mxu0 0.0
  %109 = vmatprep.subr.mxu0 0.0
  %110 = vmatpush1.msra.mxu0 0.0
  %111 = vmatprep.subr.mxu0 0.0
  %112 = vmatpush1.msra.mxu0 0.0
  %113 = vmatprep.subr.mxu0 0.0
  %114 = vmatpush1.msra.mxu0 0.0
  %115 = vmatprep.subr.mxu0 0.0
  %116 = vmatpush1.msra.mxu0 0.0
  %117 = vmatprep.subr.mxu0 0.0
  %118 = vmatpush1.msra.mxu0 0.0
  %119 = vmatprep.subr.mxu0 0.0
  %120 = vmatpush1.msra.mxu0 0.0
  %121 = vmatprep.subr.mxu0 0.0
  %122 = vmatpush1.msra.mxu0 0.0
  %123 = vmatprep.mubr.f32.mxu0 0.0
  %124 = vmatmul.mubr.f32.gmra.mrb[0].mxu0 %v57
  %v125 = vpop.f32.mrb[0].mxu0
  %v126 = vadd.f32 %v53, %v125
  %v127 = vpop.f32.mrb[0].mxu0
  %128 = vdwg.mxu0
  %v129 = vld [vmem:[%s1] sm:$0xff]
  %v130 = vld [vmem:[%s3] sm:$0x1]
  %132 = vset.pattern.permute.xlu0 0
  %133 = vperm.xlu0 %132, %v129
  %v134 = vpop.permute.xlu0 %133
  %v136 = vlaneseq
  %v137 = vshrl.u32 %v136, 7
  %v138 = vsub.s32 0, %v137
  %v139 = vrot.slane %v130, %v138
  %v140 = vmul.f32 %v134, %v139
  %v141 = vadd.f32 %v126, %v140
  %v142 = vld [vmem:[%s3 + $0x1] sm:$0x1]
  %143 = vset.pattern.permute.xlu0 1
  %144 = vperm.xlu0 %143, %v129
  %v145 = vpop.permute.xlu0 %144
  %v147 = vlaneseq
  %v148 = vshrl.u32 %v147, 7
  %v149 = vsub.s32 0, %v148
  %v150 = vrot.slane %v142, %v149
  %v151 = vmul.f32 %v145, %v150
  %v152 = vadd.f32 %v141, %v151
  %v153 = vmax.f32 %v152, 0.0
  %v154 = vld [vmem:[%s5] sm:$0xff]
  %v155 = vld [vmem:[%s5 + $0x8] sm:$0xff]
  %v156 = vld [vmem:[%s5 + $0x10] sm:$0xff]
  %v157 = vld [vmem:[%s5 + $0x18] sm:$0xff]
  %v158 = vld [vmem:[%s5 + $0x20] sm:$0xff]
  %v159 = vld [vmem:[%s5 + $0x28] sm:$0xff]
  %v160 = vld [vmem:[%s5 + $0x30] sm:$0xff]
  %v161 = vld [vmem:[%s5 + $0x38] sm:$0xff]
  %v162 = vld [vmem:[%s5 + $0x40] sm:$0xff]
  %v163 = vld [vmem:[%s5 + $0x48] sm:$0xff]
  %v164 = vld [vmem:[%s5 + $0x50] sm:$0xff]
  %v165 = vld [vmem:[%s5 + $0x58] sm:$0xff]
  %v166 = vld [vmem:[%s5 + $0x60] sm:$0xff]
  %v167 = vld [vmem:[%s5 + $0x68] sm:$0xff]
  %v168 = vld [vmem:[%s5 + $0x70] sm:$0xff]
  %v169 = vld [vmem:[%s5 + $0x78] sm:$0xff]
  %v170 = vld [vmem:[%s6] sm:$0x1]
  %v172 = vlaneseq
  %v173 = vshrl.u32 %v172, 7
  %v174 = vsub.s32 0, %v173
  %v175 = vrot.slane %v170, %v174
  %177 = vmatprep.subr.mxu0 0.0
  %178 = vmatpush1.msra.mxu0 %v154
  %179 = vmatprep.subr.mxu0 0.0
  %180 = vmatpush1.msra.mxu0 %v155
  %181 = vmatprep.subr.mxu0 0.0
  %182 = vmatpush1.msra.mxu0 %v156
  %183 = vmatprep.subr.mxu0 0.0
  %184 = vmatpush1.msra.mxu0 %v157
  %185 = vmatprep.subr.mxu0 0.0
  %186 = vmatpush1.msra.mxu0 %v158
  %187 = vmatprep.subr.mxu0 0.0
  %188 = vmatpush1.msra.mxu0 %v159
  %189 = vmatprep.subr.mxu0 0.0
  %190 = vmatpush1.msra.mxu0 %v160
  %191 = vmatprep.subr.mxu0 0.0
  %192 = vmatpush1.msra.mxu0 %v161
  %193 = vmatprep.subr.mxu0 0.0
  %194 = vmatpush1.msra.mxu0 %v162
  %195 = vmatprep.subr.mxu0 0.0
  %196 = vmatpush1.msra.mxu0 %v163
  %197 = vmatprep.subr.mxu0 0.0
  %198 = vmatpush1.msra.mxu0 %v164
  %199 = vmatprep.subr.mxu0 0.0
  %200 = vmatpush1.msra.mxu0 %v165
  %201 = vmatprep.subr.mxu0 0.0
  %202 = vmatpush1.msra.mxu0 %v166
  %203 = vmatprep.subr.mxu0 0.0
  %204 = vmatpush1.msra.mxu0 %v167
  %205 = vmatprep.subr.mxu0 0.0
  %206 = vmatpush1.msra.mxu0 %v168
  %207 = vmatprep.subr.mxu0 0.0
  %208 = vmatpush1.msra.mxu0 %v169
  %209 = vmatprep.subr.mxu0 0.0
  %210 = vmatpush1.msra.mxu0 0.0
  %211 = vmatprep.subr.mxu0 0.0
  %212 = vmatpush1.msra.mxu0 0.0
  %213 = vmatprep.subr.mxu0 0.0
  %214 = vmatpush1.msra.mxu0 0.0
  %215 = vmatprep.subr.mxu0 0.0
  %216 = vmatpush1.msra.mxu0 0.0
  %217 = vmatprep.subr.mxu0 0.0
  %218 = vmatpush1.msra.mxu0 0.0
  %219 = vmatprep.subr.mxu0 0.0
  %220 = vmatpush1.msra.mxu0 0.0
  %221 = vmatprep.subr.mxu0 0.0
  %222 = vmatpush1.msra.mxu0 0.0
  %223 = vmatprep.subr.mxu0 0.0
  %224 = vmatpush1.msra.mxu0 0.0
  %225 = vmatprep.subr.mxu0 0.0
  %226 = vmatpush1.msra.mxu0 0.0
  %227 = vmatprep.subr.mxu0 0.0
  %228 = vmatpush1.msra.mxu0 0.0
  %229 = vmatprep.subr.mxu0 0.0
  %230 = vmatpush1.msra.mxu0 0.0
  %231 = vmatprep.subr.mxu0 0.0
  %232 = vmatpush1.msra.mxu0 0.0
  %233 = vmatprep.subr.mxu0 0.0
  %234 = vmatpush1.msra.mxu0 0.0
  %235 = vmatprep.subr.mxu0 0.0
  %236 = vmatpush1.msra.mxu0 0.0
  %237 = vmatprep.subr.mxu0 0.0
  %238 = vmatpush1.msra.mxu0 0.0
  %239 = vmatprep.subr.mxu0 0.0
  %240 = vmatpush1.msra.mxu0 0.0
  %241 = vmatprep.mubr.f32.mxu0 0.0
  %242 = vmatmul.mubr.f32.gmra.mrb[0].mxu0 %v153
  %v243 = vpop.f32.mrb[0].mxu0
  %v244 = vadd.f32 %v175, %v243
  %v245 = vpop.f32.mrb[0].mxu0
  %246 = vdwg.mxu0
  %vm247 = vcmask 523264
  %248 = vst.msk [vmem:[%s7] sm:$0xff] %vm247, %v244
  // Predicated region
  $region30: #{state_encoder_forward.1} parent=0 // pred_check
    _
  $region31: #{state_encoder_forward.1} parent=0 // pred_check_branch
    %250 = sbr.rel (0) target = $region33
  $region32: #{state_encoder_forward.1} parent=0 // pred_region
    _
  $region33: #{state_encoder_forward.1} parent=0 // pred_fallthru
    _
  // Predicated region
  $region34: #{state_encoder_forward.1} parent=0 // pred_check
    _
  $region35: #{state_encoder_forward.1} parent=0 // pred_check_branch
    %252 = sbr.rel (0) target = $region37
  $region36: #{state_encoder_forward.1} parent=0 // pred_region
    _
  $region37: #{state_encoder_forward.1} parent=0 // pred_fallthru
    _

</llo_original>
